<compile_context>
chip_gen: v7x
topology: tpu7x:2x2x1
jax: 0.10.0
libtpu: 0.0.40
codegen_flags: <defaults>
</compile_context>

<pallas_src>
import jax
import jax.numpy as jnp
import numpy as np
from jax.experimental import pallas as pl
from jax.experimental.pallas import tpu as pltpu


# ------------------------------ Pallas kernel ------------------------------ #

def grn_kernel(x_ref, gb_ref, o_ref):
    """GRN for one batch image.

    x_ref : (1, H*W, C)  input block
    gb_ref: (2, C)       packed parameters: row 0 = gamma, row 1 = beta
    o_ref : (1, H*W, C)  output block
    """
    x = x_ref[0]                                              # (HW, C) f32
    gb = gb_ref[...]                                          # (2, C)
    gamma = gb[0:1, :]                                        # (1, C)
    beta = gb[1:2, :]                                         # (1, C)

    # Gx = L2 norm over the spatial axis (per-lane sublane reduce).
    gx = jnp.sqrt(jnp.sum(x * x, axis=0, keepdims=True))      # (1, C)
    # Nx = Gx / (mean over channels + eps)   (single lane reduce on the XLU).
    nx = gx / (jnp.mean(gx, axis=-1, keepdims=True) + 1e-6)   # (1, C)

    o_ref[0] = (gamma * nx + 1.0) * x + beta


# --------------------------------- wrapper --------------------------------- #

def grn_forward(x_nhwc, gamma, beta):
    """GRNwithNHWC.forward with use_bias=True. x_nhwc: (N, H, W, C)."""
    # For use_bias=False, simply drop the `+ beta` term / pass beta = zeros.
    N, H, W, C = x_nhwc.shape
    HW = H * W
    x2 = x_nhwc.reshape(N, HW, C).astype(jnp.float32)         # contiguous -> free reshape
    gb = jnp.stack([gamma.reshape(C), beta.reshape(C)], axis=0).astype(jnp.float32)

    out = pl.pallas_call(
        grn_kernel,
        out_shape=jax.ShapeDtypeStruct((N, HW, C), jnp.float32),
        grid=(N,),
        in_specs=[
            pl.BlockSpec((1, HW, C), lambda n: (n, 0, 0)),    # one image per step
            pl.BlockSpec((2, C), lambda n: (0, 0)),           # packed gamma/beta slab
        ],
        out_specs=pl.BlockSpec((1, HW, C), lambda n: (n, 0, 0)),
        compiler_params=pltpu.CompilerParams(
            dimension_semantics=("parallel",)),               # batch steps independent
    )(x2, gb)
    return out.reshape(N, H, W, C)


# ----------------------------- pure-JAX reference --------------------------- #

def reference_grn(x, gamma, beta):
    gx = jnp.sqrt(jnp.sum(x * x, axis=(1, 2), keepdims=True))          # torch.norm p=2
    nx = gx / (jnp.mean(gx, axis=-1, keepdims=True) + 1e-6)
    return (gamma.reshape(1, 1, 1, -1) * nx + 1.0) * x + beta.reshape(1, 1, 1, -1)


# ----------------------------------- main ----------------------------------- #

if __name__ == "__main__":
    N, H, W, C = 2, 16, 16, 32
    key = jax.random.PRNGKey(0)
    kx, kg, kb = jax.random.split(key, 3)
    x = jax.random.normal(kx, (N, H, W, C), dtype=jnp.float32)          # module assumes NHWC
    # nn.Parameter defaults are zeros (identity map); use non-zero values so the
    # numerical check actually exercises the normalization path.
    gamma = (0.1 * jax.random.normal(kg, (C,))).astype(jnp.float32)
    beta = (0.1 * jax.random.normal(kb, (C,))).astype(jnp.float32)

    out = jax.jit(grn_forward)(x, gamma, beta)
    out = jax.block_until_ready(out)

    ref = reference_grn(x, gamma, beta)
    np.testing.assert_allclose(np.asarray(out), np.asarray(ref), rtol=1e-4, atol=1e-5)
    assert out.shape == x.shape and out.dtype == jnp.float32

    print("KERNEL_OK")
</pallas_src>

<mosaic_0001>
module attributes {stable_mosaic.version = 11 : i64} {
  func.func @grn_kernel(%arg0: i32, %arg1: memref<1x256x32xf32, #tpu.memory_space<vmem>>, %arg2: memref<2x32xf32, #tpu.memory_space<vmem>>, %arg3: memref<1x256x32xf32, #tpu.memory_space<vmem>>) attributes {dimension_semantics = [#tpu.dimension_semantics<parallel>], iteration_bounds = array<i64: 2>, scalar_prefetch = 0 : i64, scratch_operands = 0 : i64, tpu.core_type = #tpu.core_type<tc>, window_params = [{transform_indices = @transform_0, window_bounds = array<i64: 1, 256, 32>}, {pipeline_mode = #tpu.pipeline_mode<synchronous>, transform_indices = @transform_1, window_bounds = array<i64: 2, 32>}, {transform_indices = @transform_2, window_bounds = array<i64: 1, 256, 32>}]} {
    %c0 = arith.constant 0 : index
    %c0_0 = arith.constant 0 : index
    %c0_1 = arith.constant 0 : index
    %0 = vector.load %arg1[%c0, %c0_0, %c0_1] : memref<1x256x32xf32, #tpu.memory_space<vmem>>, vector<1x256x32xf32>
    %1 = vector.shape_cast %0 : vector<1x256x32xf32> to vector<256x32xf32>
    %c0_2 = arith.constant 0 : index
    %c0_3 = arith.constant 0 : index
    %2 = vector.load %arg2[%c0_2, %c0_3] : memref<2x32xf32, #tpu.memory_space<vmem>>, vector<2x32xf32>
    %3 = vector.extract_strided_slice %2 {offsets = [0, 0], sizes = [1, 32], strides = [1, 1]} : vector<2x32xf32> to vector<1x32xf32>
    %4 = vector.extract_strided_slice %2 {offsets = [1, 0], sizes = [1, 32], strides = [1, 1]} : vector<2x32xf32> to vector<1x32xf32>
    %5 = arith.mulf %1, %1 : vector<256x32xf32>
    %cst = arith.constant dense<0.000000e+00> : vector<32xf32>
    %6 = vector.multi_reduction <add>, %5, %cst [0] : vector<256x32xf32> to vector<32xf32>
    %7 = vector.shape_cast %6 : vector<32xf32> to vector<1x32xf32>
    %8 = math.sqrt %7 : vector<1x32xf32>
    %cst_4 = arith.constant dense<0.000000e+00> : vector<1xf32>
    %9 = vector.multi_reduction <add>, %8, %cst_4 [1] : vector<1x32xf32> to vector<1xf32>
    %10 = vector.shape_cast %9 : vector<1xf32> to vector<1x1xf32>
    %cst_5 = arith.constant 3.200000e+01 : f32
    %11 = vector.broadcast %cst_5 : f32 to vector<1x1xf32>
    %12 = arith.divf %10, %11 : vector<1x1xf32>
    %cst_6 = arith.constant 9.99999997E-7 : f32
    %13 = vector.broadcast %cst_6 : f32 to vector<1x1xf32>
    %14 = arith.addf %12, %13 : vector<1x1xf32>
    %15 = vector.broadcast %14 : vector<1x1xf32> to vector<1x32xf32>
    %16 = arith.divf %8, %15 : vector<1x32xf32>
    %17 = arith.mulf %3, %16 : vector<1x32xf32>
    %cst_7 = arith.constant 1.000000e+00 : f32
    %18 = vector.broadcast %cst_7 : f32 to vector<1x32xf32>
    %19 = arith.addf %17, %18 : vector<1x32xf32>
    %20 = vector.broadcast %19 : vector<1x32xf32> to vector<256x32xf32>
    %21 = arith.mulf %20, %1 : vector<256x32xf32>
    %22 = vector.broadcast %4 : vector<1x32xf32> to vector<256x32xf32>
    %23 = arith.addf %21, %22 : vector<256x32xf32>
    %c0_8 = arith.constant 0 : index
    %c0_9 = arith.constant 0 : index
    %c0_10 = arith.constant 0 : index
    %24 = vector.load %arg3[%c0_8, %c0_9, %c0_10] : memref<1x256x32xf32, #tpu.memory_space<vmem>>, vector<1x256x32xf32>
    %25 = vector.shape_cast %24 : vector<1x256x32xf32> to vector<256x32xf32>
    %26 = vector.shape_cast %23 : vector<256x32xf32> to vector<1x256x32xf32>
    tpu.vector_store %arg3[%c0_8, %c0_9, %c0_10], %26 {strides = array<i32>} : memref<1x256x32xf32, #tpu.memory_space<vmem>>, vector<1x256x32xf32>,
    return
  }
  func.func @transform_0(%arg0: i32) -> (i32, i32, i32) {
    %c0_i32 = arith.constant 0 : i32
    %c0_i32_0 = arith.constant 0 : i32
    %c0_i32_1 = arith.constant 0 : i32
    return %arg0, %c0_i32, %c0_i32_0 : i32, i32, i32
  }
  func.func @transform_1(%arg0: i32) -> (i32, i32) {
    %c0_i32 = arith.constant 0 : i32
    %c0_i32_0 = arith.constant 0 : i32
    %c0_i32_1 = arith.constant 0 : i32
    return %c0_i32, %c0_i32_0 : i32, i32
  }
  func.func @transform_2(%arg0: i32) -> (i32, i32, i32) {
    %c0_i32 = arith.constant 0 : i32
    %c0_i32_0 = arith.constant 0 : i32
    %c0_i32_1 = arith.constant 0 : i32
    return %arg0, %c0_i32, %c0_i32_0 : i32, i32, i32
  }
}

</mosaic_0001>

<llo_original>
// kernel: grn_forward.1
$region0: #{grn_forward.1}
  #allocation0 [shape = 'u32[]', space=smem, size = 0x4, offset = 0x4, fixed_abs, tag = 'smem constant byte address 0x4 - core index']
  #allocation1 [shape = 'u32[144,128]{1,0:T(1,128)}', space=vmem, size = 0x12000, scoped, tag = 'internal scratch']
  %s0 = inlined_call_operand.hbm [shape: f32[2,256,32], index: 0, kind: input, shape index: {}]
  %s1 = inlined_call_operand.vmem [shape: f32[2,32], index: 1, kind: input, shape index: {}]
  %s2 = inlined_call_operand.hbm [shape: f32[2,256,32], index: 2, kind: output, shape index: {}]
  %s3 = sld [smem:[#allocation0]]
  $region45: #{grn_forward.1} parent=0
    _
  %s5 = ssub.s32 1, %s3
  %s6 = scalar_select 0, %s5, %s3
  $region1: #{grn_forward.1} parent=0
    #allocation2 [shape = 'u8[262144]{0}', space=vmem, size = 0x40000, scoped, tag = 'input window, operand 0']
    #allocation3 [shape = 's32[2]{0}', space=sflag, size = 0x8, scoped, tag = 'scoped memory for grn_forward.1']
    #allocation4 [shape = 's32[2]{0}', space=sflag, size = 0x8, scoped, tag = 'scoped memory for grn_forward.1']
    #allocation5 [shape = 'u8[262144]{0}', space=vmem, size = 0x40000, scoped, tag = 'output window, operand 0']
    %7 = vsyncpa [#allocation3], 0
    %s8 = scalar_lea.sflag [#allocation3], 1
    %9 = vsyncpa %s8, 0
    %10 = vsyncpa [#allocation4], 0
    %s11 = scalar_lea.sflag [#allocation4], 1
    %12 = vsyncpa %s11, 0
    loop: start=0, step=1, limit=4
    $region2: #{grn_forward.1} parent=1 // loop_pre_header
      _
    $region3: #{grn_forward.1} parent=1 // loop_header
      %s14 = sphi 0, %s18
      %p15 = scmp.ge.s32.totalorder %s14, 4
      %s24 = sphi 0, %s26
      %s27 = sphi 0, %s24
      %s28 = sphi 0, %s27
      %s44 = sphi 0, %s28
      %s48 = sphi 0, %s48
      %s50 = sphi 0, %s48
      %s51 = sphi 0, %s50
      %s65 = sphi 0, %s51
      %s71 = sphi 0, %s73
      %s74 = sphi 0, %s71
      %s75 = sphi 0, %s74
      %s91 = sphi 0, %s75
    $region4: #{grn_forward.1} parent=1 // loop_header_branch
      %17 = sbr.rel (%p15) target = $region8
    $region5: #{grn_forward.1} parent=1 // loop_body
      %s19 = ssub.s32 %s14, 1
      %s20 = ssub.s32 %s14, 2
      %s21 = sadd.s32 %s14, 1
      %s22 = ssub.s32 %s14, %s21
      %p23 = scmp.eq.s32.totalorder %s22, 0
      %s25 = sadd.s32 %s24, 1
      %s26 = scalar_select %p23, %s24, %s25
      %p29 = pneg %p23
      %p30 = scmp.eq.s32.totalorder %s14, 1
      %p31 = por %p29, %p30
      %p32 = scmp.ne.s32.totalorder %s24, %s27
      %p33 = scmp.eq.s32.totalorder %s14, 0
      %p34 = por %p32, %p33
      %p35 = scmp.ne.s32.totalorder %s24, %s27
      %p36 = scmp.eq.s32.totalorder %s19, 1
      %p37 = por %p35, %p36
      %p38 = scmp.ne.s32.totalorder %s27, %s28
      %p39 = scmp.eq.s32.totalorder %s19, 0
      %p40 = por %p38, %p39
      %p41 = scmp.ne.s32.totalorder %s27, %s28
      %p42 = scmp.eq.s32.totalorder %s20, 1
      %p43 = por %p41, %p42
      %p45 = scmp.ne.s32.totalorder %s28, %s44
      %p46 = scmp.eq.s32.totalorder %s20, 0
      %p47 = por %p45, %p46
      %s49 = sadd.s32 %s48, 1
      %p52 = scmp.eq.s32.totalorder %s14, 1
      %p53 = scmp.ne.s32.totalorder %s48, %s50
      %p54 = scmp.eq.s32.totalorder %s14, 0
      %p55 = por %p53, %p54
      %p56 = scmp.ne.s32.totalorder %s48, %s50
      %p57 = scmp.eq.s32.totalorder %s19, 1
      %p58 = por %p56, %p57
      %p59 = scmp.ne.s32.totalorder %s50, %s51
      %p60 = scmp.eq.s32.totalorder %s19, 0
      %p61 = por %p59, %p60
      %p62 = scmp.ne.s32.totalorder %s50, %s51
      %p63 = scmp.eq.s32.totalorder %s20, 1
      %p64 = por %p62, %p63
      %p66 = scmp.ne.s32.totalorder %s51, %s65
      %p67 = scmp.eq.s32.totalorder %s20, 0
      %p68 = por %p66, %p67
      %s69 = ssub.s32 %s14, %s21
      %p70 = scmp.eq.s32.totalorder %s69, 0
      %s72 = sadd.s32 %s71, 1
      %s73 = scalar_select %p70, %s71, %s72
      %p76 = pneg %p70
      %p77 = scmp.eq.s32.totalorder %s14, 1
      %p78 = por %p76, %p77
      %p79 = scmp.ne.s32.totalorder %s71, %s74
      %p80 = scmp.eq.s32.totalorder %s14, 0
      %p81 = por %p79, %p80
      %p82 = scmp.ne.s32.totalorder %s71, %s74
      %p83 = scmp.eq.s32.totalorder %s19, 1
      %p84 = por %p82, %p83
      %p85 = scmp.ne.s32.totalorder %s74, %s75
      %p86 = scmp.eq.s32.totalorder %s19, 0
      %p87 = por %p85, %p86
      %p88 = scmp.ne.s32.totalorder %s74, %s75
      %p89 = scmp.eq.s32.totalorder %s20, 1
      %p90 = por %p88, %p89
      %p92 = scmp.ne.s32.totalorder %s75, %s91
      %p93 = scmp.eq.s32.totalorder %s20, 0
      %p94 = por %p92, %p93
      %p95 = scmp.le.s32.totalorder 1, %s14
      %p96 = scmp.lt.s32.totalorder %s14, 3
      %p97 = pnand %p95, %p96
      %p98 = pneg %p97
      // Predicated region
      $region9: #{grn_forward.1} parent=5 // pred_check
        _
      $region10: #{grn_forward.1} parent=5 // pred_check_branch
        %100 = sbr.rel (%p97) target = $region12
      $region11: #{grn_forward.1} parent=5 // pred_region
        %s101 = ssub.s32 %s14, 1
        // Predicated region
        $region13: #{grn_forward.1} parent=11 // pred_check
          %p102 = pneg %p61
        $region14: #{grn_forward.1} parent=11 // pred_check_branch
          %104 = sbr.rel (%p102) target = $region16
        $region15: #{grn_forward.1} parent=11 // pred_region
          _
        $region16: #{grn_forward.1} parent=11 // pred_fallthru
          _
      $region12: #{grn_forward.1} parent=5 // pred_fallthru
        _
      %p105 = scmp.lt.s32.totalorder %s14, 2
      // Predicated region
      $region17: #{grn_forward.1} parent=5 // pred_check
        %p106 = pneg %p105
      $region18: #{grn_forward.1} parent=5 // pred_check_branch
        %108 = sbr.rel (%p106) target = $region20
      $region19: #{grn_forward.1} parent=5 // pred_region
        // Predicated region
        $region21: #{grn_forward.1} parent=19 // pred_check
          %p109 = pneg %p34
        $region22: #{grn_forward.1} parent=19 // pred_check_branch
          %111 = sbr.rel (%p109) target = $region24
        $region23: #{grn_forward.1} parent=19 // pred_region
          %s112 = sand.u32 %s24, 1
          %s113 = scalar_lea.sflag [#allocation3], %s112
          %s114 = sand.u32 %s24, 1
          %s115 = smul.addr %s114, 256
          %s116 = scalar_lea.vmem [#allocation2], %s115
          %s118 = ssub.s32 4096, 4096
          %119 = vsyncadd %s113, %s118
          %s120 = smul.addr %s14, 32
          %s121 = smul.addr %s120, 128
          %s122 = scalar_lea.hbm %s0, %s121
          %s123 = sshll.u32 %s116, 4
          %s124 = int_to_ptr.vmem [resolvable:$true] %s123
          %129 = dma.hbm_to_vmem [thread:$0]  %s122, 4096, %s124, %s113, 128, 128, 8
        $region24: #{grn_forward.1} parent=19 // pred_fallthru
          _
      $region20: #{grn_forward.1} parent=5 // pred_fallthru
        _
      %p130 = scmp.le.s32.totalorder 1, %s14
      %p131 = scmp.lt.s32.totalorder %s14, 3
      %p132 = pnand %p130, %p131
      %p133 = pneg %p132
      // Predicated region
      $region25: #{grn_forward.1} parent=5 // pred_check
        _
      $region26: #{grn_forward.1} parent=5 // pred_check_branch
        %135 = sbr.rel (%p132) target = $region28
      $region27: #{grn_forward.1} parent=5 // pred_region
        %s136 = ssub.s32 %s14, 1
        %s137 = sand.u32 %s27, 1
        %s138 = scalar_lea.sflag [#allocation3], %s137
        %s139 = sand.u32 %s27, 1
        %s140 = smul.addr %s139, 256
        %s141 = scalar_lea.vmem [#allocation2], %s140
        // Predicated region
        $region29: #{grn_forward.1} parent=27 // pred_check
          %p142 = pneg %p40
        $region30: #{grn_forward.1} parent=27 // pred_check_branch
          %144 = sbr.rel (%p142) target = $region32
        $region31: #{grn_forward.1} parent=27 // pred_region
          %145 = dma.done %s138, 4096
        $region32: #{grn_forward.1} parent=27 // pred_fallthru
          _
        %s146 = sand.u32 %s27, 1
        %s147 = scalar_lea.sflag [#allocation3], %s146
        %s148 = sand.u32 %s27, 1
        %s149 = smul.addr %s148, 256
        %s150 = scalar_lea.vmem [#allocation2], %s149
        %p151 = pneg %p40
        %p152 = pneg %p37
        %p153 = pneg %p61
        %p154 = pneg %p58
        %p155 = pneg %p87
        %p156 = pneg %p84
        %s157 = sand.u32 %s74, 1
        %s158 = scalar_lea.sflag [#allocation4], %s157
        %s159 = sand.u32 %s74, 1
        %s160 = smul.addr %s159, 256
        %s161 = scalar_lea.vmem [#allocation5], %s160
        %v162 = vld [vmem:[%s141] sm:$0xff]
        %v163 = vld [vmem:[%s141 + $0x8] sm:$0xff]
        %v164 = vld [vmem:[%s141 + $0x10] sm:$0xff]
        %v165 = vld [vmem:[%s141 + $0x18] sm:$0xff]
        %v166 = vld [vmem:[%s141 + $0x20] sm:$0xff]
        %v167 = vld [vmem:[%s141 + $0x28] sm:$0xff]
        %v168 = vld [vmem:[%s141 + $0x30] sm:$0xff]
        %v169 = vld [vmem:[%s141 + $0x38] sm:$0xff]
        %v170 = vld [vmem:[%s141 + $0x40] sm:$0xff]
        %v171 = vld [vmem:[%s141 + $0x48] sm:$0xff]
        %v172 = vld [vmem:[%s141 + $0x50] sm:$0xff]
        %v173 = vld [vmem:[%s141 + $0x58] sm:$0xff]
        %v174 = vld [vmem:[%s141 + $0x60] sm:$0xff]
        %v175 = vld [vmem:[%s141 + $0x68] sm:$0xff]
        %v176 = vld [vmem:[%s141 + $0x70] sm:$0xff]
        %v177 = vld [vmem:[%s141 + $0x78] sm:$0xff]
        %v178 = vld [vmem:[%s141 + $0x80] sm:$0xff]
        %v179 = vld [vmem:[%s141 + $0x88] sm:$0xff]
        %v180 = vld [vmem:[%s141 + $0x90] sm:$0xff]
        %v181 = vld [vmem:[%s141 + $0x98] sm:$0xff]
        %v182 = vld [vmem:[%s141 + $0xa0] sm:$0xff]
        %v183 = vld [vmem:[%s141 + $0xa8] sm:$0xff]
        %v184 = vld [vmem:[%s141 + $0xb0] sm:$0xff]
        %v185 = vld [vmem:[%s141 + $0xb8] sm:$0xff]
        %v186 = vld [vmem:[%s141 + $0xc0] sm:$0xff]
        %v187 = vld [vmem:[%s141 + $0xc8] sm:$0xff]
        %v188 = vld [vmem:[%s141 + $0xd0] sm:$0xff]
        %v189 = vld [vmem:[%s141 + $0xd8] sm:$0xff]
        %v190 = vld [vmem:[%s141 + $0xe0] sm:$0xff]
        %v191 = vld [vmem:[%s141 + $0xe8] sm:$0xff]
        %v192 = vld [vmem:[%s141 + $0xf0] sm:$0xff]
        %v193 = vld [vmem:[%s141 + $0xf8] sm:$0xff]
        %v194 = vld [vmem:[%s1] sm:$0x3]
        %v195 = vmul.f32 %v162, %v162
        %v196 = vmul.f32 %v163, %v163
        %v197 = vmul.f32 %v164, %v164
        %v198 = vmul.f32 %v165, %v165
        %v199 = vmul.f32 %v166, %v166
        %v200 = vmul.f32 %v167, %v167
        %v201 = vmul.f32 %v168, %v168
        %v202 = vmul.f32 %v169, %v169
        %v203 = vmul.f32 %v170, %v170
        %v204 = vmul.f32 %v171, %v171
        %v205 = vmul.f32 %v172, %v172
        %v206 = vmul.f32 %v173, %v173
        %v207 = vmul.f32 %v174, %v174
        %v208 = vmul.f32 %v175, %v175
        %v209 = vmul.f32 %v176, %v176
        %v210 = vmul.f32 %v177, %v177
        %v211 = vmul.f32 %v178, %v178
        %v212 = vmul.f32 %v179, %v179
        %v213 = vmul.f32 %v180, %v180
        %v214 = vmul.f32 %v181, %v181
        %v215 = vmul.f32 %v182, %v182
        %v216 = vmul.f32 %v183, %v183
        %v217 = vmul.f32 %v184, %v184
        %v218 = vmul.f32 %v185, %v185
        %v219 = vmul.f32 %v186, %v186
        %v220 = vmul.f32 %v187, %v187
        %v221 = vmul.f32 %v188, %v188
        %v222 = vmul.f32 %v189, %v189
        %v223 = vmul.f32 %v190, %v190
        %v224 = vmul.f32 %v191, %v191
        %v225 = vmul.f32 %v192, %v192
        %v226 = vmul.f32 %v193, %v193
        %vm227 = vcmask 261120
        %v228 = vsel %vm227, %v195, 0.0
        %v229 = vsel %vm227, %v196, 0.0
        %v230 = vadd.f32 %v228, %v229
        %v231 = vsel %vm227, %v197, 0.0
        %v232 = vadd.f32 %v230, %v231
        %v233 = vsel %vm227, %v198, 0.0
        %v234 = vadd.f32 %v232, %v233
        %v235 = vsel %vm227, %v199, 0.0
        %v236 = vadd.f32 %v234, %v235
        %v237 = vsel %vm227, %v200, 0.0
        %v238 = vadd.f32 %v236, %v237
        %v239 = vsel %vm227, %v201, 0.0
        %v240 = vadd.f32 %v238, %v239
        %v241 = vsel %vm227, %v202, 0.0
        %v242 = vadd.f32 %v240, %v241
        %v243 = vsel %vm227, %v203, 0.0
        %v244 = vadd.f32 %v242, %v243
        %v245 = vsel %vm227, %v204, 0.0
        %v246 = vadd.f32 %v244, %v245
        %v247 = vsel %vm227, %v205, 0.0
        %v248 = vadd.f32 %v246, %v247
        %v249 = vsel %vm227, %v206, 0.0
        %v250 = vadd.f32 %v248, %v249
        %v251 = vsel %vm227, %v207, 0.0
        %v252 = vadd.f32 %v250, %v251
        %v253 = vsel %vm227, %v208, 0.0
        %v254 = vadd.f32 %v252, %v253
        %v255 = vsel %vm227, %v209, 0.0
        %v256 = vadd.f32 %v254, %v255
        %v257 = vsel %vm227, %v210, 0.0
        %v258 = vadd.f32 %v256, %v257
        %v259 = vsel %vm227, %v211, 0.0
        %v260 = vadd.f32 %v258, %v259
        %v261 = vsel %vm227, %v212, 0.0
        %v262 = vadd.f32 %v260, %v261
        %v263 = vsel %vm227, %v213, 0.0
        %v264 = vadd.f32 %v262, %v263
        %v265 = vsel %vm227, %v214, 0.0
        %v266 = vadd.f32 %v264, %v265
        %v267 = vsel %vm227, %v215, 0.0
        %v268 = vadd.f32 %v266, %v267
        %v269 = vsel %vm227, %v216, 0.0
        %v270 = vadd.f32 %v268, %v269
        %v271 = vsel %vm227, %v217, 0.0
        %v272 = vadd.f32 %v270, %v271
        %v273 = vsel %vm227, %v218, 0.0
        %v274 = vadd.f32 %v272, %v273
        %v275 = vsel %vm227, %v219, 0.0
        %v276 = vadd.f32 %v274, %v275
        %v277 = vsel %vm227, %v220, 0.0
        %v278 = vadd.f32 %v276, %v277
        %v279 = vsel %vm227, %v221, 0.0
        %v280 = vadd.f32 %v278, %v279
        %v281 = vsel %vm227, %v222, 0.0
        %v282 = vadd.f32 %v280, %v281
        %v283 = vsel %vm227, %v223, 0.0
        %v284 = vadd.f32 %v282, %v283
        %v285 = vsel %vm227, %v224, 0.0
        %v286 = vadd.f32 %v284, %v285
        %v287 = vsel %vm227, %v225, 0.0
        %v288 = vadd.f32 %v286, %v287
        %v289 = vsel %vm227, %v226, 0.0
        %v290 = vadd.f32 %v288, %v289
        %v291 = vrot.slane %v290, 4
        %v292 = vadd.f32 %v290, %v291
        %v293 = vrot.slane %v292, 2
        %v294 = vadd.f32 %v292, %v293
        %v295 = vrot.slane %v294, 1
        %v296 = vadd.f32 %v294, %v295
        %v297 = vrsqrt.pop %v296
        %v298 = vmul.f32 %v296, %v297
        %vm299 = vcmp.eq.f32.partialorder %v296, inf
        %v300 = vsel %vm299, %v296, %v298
        %vm301 = vcmp.eq.f32.partialorder %v296, 0.0
        %v302 = vand.u32 %v296, 2147483648
        %v303 = vsel %vm301, %v302, %v300
        %v304 = vsel %vm227, %v303, 0.0
        %305 = vadd.xlane.f32.xlu0 %v304
        %v306 = vpop.xlane.xlu0 %305
        %v307 = vrcp.pop 32.0
        %v308 = vmul.f32 %v306, %v307
        %v309 = vadd.f32 %v308, 1e-06
        %v310 = vrcp.pop %v309
        %v311 = vmul.f32 %v303, %v310
        %v312 = vmul.f32 %v194, %v311
        %v313 = vadd.f32 %v312, 1.0
        %v314 = vlaneseq
        %v315 = vshrl.u32 %v314, 7
        %v316 = vsub.s32 0, %v315
        %v317 = vrot.slane %v313, %v316
        %v318 = vmul.f32 %v317, %v162
        %v319 = vmul.f32 %v317, %v163
        %v320 = vmul.f32 %v317, %v164
        %v321 = vmul.f32 %v317, %v165
        %v322 = vmul.f32 %v317, %v166
        %v323 = vmul.f32 %v317, %v167
        %v324 = vmul.f32 %v317, %v168
        %v325 = vmul.f32 %v317, %v169
        %v326 = vmul.f32 %v317, %v170
        %v327 = vmul.f32 %v317, %v171
        %v328 = vmul.f32 %v317, %v172
        %v329 = vmul.f32 %v317, %v173
        %v330 = vmul.f32 %v317, %v174
        %v331 = vmul.f32 %v317, %v175
        %v332 = vmul.f32 %v317, %v176
        %v333 = vmul.f32 %v317, %v177
        %v334 = vmul.f32 %v317, %v178
        %v335 = vmul.f32 %v317, %v179
        %v336 = vmul.f32 %v317, %v180
        %v337 = vmul.f32 %v317, %v181
        %v338 = vmul.f32 %v317, %v182
        %v339 = vmul.f32 %v317, %v183
        %v340 = vmul.f32 %v317, %v184
        %v341 = vmul.f32 %v317, %v185
        %v342 = vmul.f32 %v317, %v186
        %v343 = vmul.f32 %v317, %v187
        %v344 = vmul.f32 %v317, %v188
        %v345 = vmul.f32 %v317, %v189
        %v346 = vmul.f32 %v317, %v190
        %v347 = vmul.f32 %v317, %v191
        %v348 = vmul.f32 %v317, %v192
        %v349 = vmul.f32 %v317, %v193
        %v350 = vlaneseq
        %v351 = vshrl.u32 %v350, 7
        %v352 = vsub.s32 1, %v351
        %v353 = vrot.slane %v194, %v352
        %v354 = vadd.f32 %v318, %v353
        %v355 = vadd.f32 %v319, %v353
        %v356 = vadd.f32 %v320, %v353
        %v357 = vadd.f32 %v321, %v353
        %v358 = vadd.f32 %v322, %v353
        %v359 = vadd.f32 %v323, %v353
        %v360 = vadd.f32 %v324, %v353
        %v361 = vadd.f32 %v325, %v353
        %v362 = vadd.f32 %v326, %v353
        %v363 = vadd.f32 %v327, %v353
        %v364 = vadd.f32 %v328, %v353
        %v365 = vadd.f32 %v329, %v353
        %v366 = vadd.f32 %v330, %v353
        %v367 = vadd.f32 %v331, %v353
        %v368 = vadd.f32 %v332, %v353
        %v369 = vadd.f32 %v333, %v353
        %v370 = vadd.f32 %v334, %v353
        %v371 = vadd.f32 %v335, %v353
        %v372 = vadd.f32 %v336, %v353
        %v373 = vadd.f32 %v337, %v353
        %v374 = vadd.f32 %v338, %v353
        %v375 = vadd.f32 %v339, %v353
        %v376 = vadd.f32 %v340, %v353
        %v377 = vadd.f32 %v341, %v353
        %v378 = vadd.f32 %v342, %v353
        %v379 = vadd.f32 %v343, %v353
        %v380 = vadd.f32 %v344, %v353
        %v381 = vadd.f32 %v345, %v353
        %v382 = vadd.f32 %v346, %v353
        %v383 = vadd.f32 %v347, %v353
        %v384 = vadd.f32 %v348, %v353
        %v385 = vadd.f32 %v349, %v353
        %386 = vst.msk [vmem:[%s161] sm:$0xff] %vm227, %v354
        %387 = vst.msk [vmem:[%s161 + $0x8] sm:$0xff] %vm227, %v355
        %388 = vst.msk [vmem:[%s161 + $0x10] sm:$0xff] %vm227, %v356
        %389 = vst.msk [vmem:[%s161 + $0x18] sm:$0xff] %vm227, %v357
        %390 = vst.msk [vmem:[%s161 + $0x20] sm:$0xff] %vm227, %v358
        %391 = vst.msk [vmem:[%s161 + $0x28] sm:$0xff] %vm227, %v359
        %392 = vst.msk [vmem:[%s161 + $0x30] sm:$0xff] %vm227, %v360
        %393 = vst.msk [vmem:[%s161 + $0x38] sm:$0xff] %vm227, %v361
        %394 = vst.msk [vmem:[%s161 + $0x40] sm:$0xff] %vm227, %v362
        %395 = vst.msk [vmem:[%s161 + $0x48] sm:$0xff] %vm227, %v363
        %396 = vst.msk [vmem:[%s161 + $0x50] sm:$0xff] %vm227, %v364
        %397 = vst.msk [vmem:[%s161 + $0x58] sm:$0xff] %vm227, %v365
        %398 = vst.msk [vmem:[%s161 + $0x60] sm:$0xff] %vm227, %v366
        %399 = vst.msk [vmem:[%s161 + $0x68] sm:$0xff] %vm227, %v367
        %400 = vst.msk [vmem:[%s161 + $0x70] sm:$0xff] %vm227, %v368
        %401 = vst.msk [vmem:[%s161 + $0x78] sm:$0xff] %vm227, %v369
        %402 = vst.msk [vmem:[%s161 + $0x80] sm:$0xff] %vm227, %v370
        %403 = vst.msk [vmem:[%s161 + $0x88] sm:$0xff] %vm227, %v371
        %404 = vst.msk [vmem:[%s161 + $0x90] sm:$0xff] %vm227, %v372
        %405 = vst.msk [vmem:[%s161 + $0x98] sm:$0xff] %vm227, %v373
        %406 = vst.msk [vmem:[%s161 + $0xa0] sm:$0xff] %vm227, %v374
        %407 = vst.msk [vmem:[%s161 + $0xa8] sm:$0xff] %vm227, %v375
        %408 = vst.msk [vmem:[%s161 + $0xb0] sm:$0xff] %vm227, %v376
        %409 = vst.msk [vmem:[%s161 + $0xb8] sm:$0xff] %vm227, %v377
        %410 = vst.msk [vmem:[%s161 + $0xc0] sm:$0xff] %vm227, %v378
        %411 = vst.msk [vmem:[%s161 + $0xc8] sm:$0xff] %vm227, %v379
        %412 = vst.msk [vmem:[%s161 + $0xd0] sm:$0xff] %vm227, %v380
        %413 = vst.msk [vmem:[%s161 + $0xd8] sm:$0xff] %vm227, %v381
        %414 = vst.msk [vmem:[%s161 + $0xe0] sm:$0xff] %vm227, %v382
        %415 = vst.msk [vmem:[%s161 + $0xe8] sm:$0xff] %vm227, %v383
        %416 = vst.msk [vmem:[%s161 + $0xf0] sm:$0xff] %vm227, %v384
        %417 = vst.msk [vmem:[%s161 + $0xf8] sm:$0xff] %vm227, %v385
        %s418 = sand.u32 %s74, 1
        %s419 = scalar_lea.sflag [#allocation4], %s418
        %s420 = sand.u32 %s74, 1
        %s421 = smul.addr %s420, 256
        %s422 = scalar_lea.vmem [#allocation5], %s421
        // Predicated region
        $region33: #{grn_forward.1} parent=27 // pred_check
          %p423 = pneg %p84
        $region34: #{grn_forward.1} parent=27 // pred_check_branch
          %425 = sbr.rel (%p423) target = $region36
        $region35: #{grn_forward.1} parent=27 // pred_region
          %s427 = ssub.s32 4096, 4096
          %428 = vsyncadd %s419, %s427
          %s429 = smul.addr %s19, 32
          %s430 = smul.addr %s429, 128
          %s431 = scalar_lea.hbm %s2, %s430
          %s432 = sshll.u32 %s422, 4
          %s433 = int_to_ptr.vmem [resolvable:$true] %s432
          %438 = dma.vmem_to_hbm [thread:$0]  %s433, 4096, %s431, %s419, 128, 128, 8
        $region36: #{grn_forward.1} parent=27 // pred_fallthru
          _
      $region28: #{grn_forward.1} parent=5 // pred_fallthru
        _
      %p439 = scmp.le.s32.totalorder 2, %s14
      // Predicated region
      $region37: #{grn_forward.1} parent=5 // pred_check
        %p440 = pneg %p439
      $region38: #{grn_forward.1} parent=5 // pred_check_branch
        %442 = sbr.rel (%p440) target = $region40
      $region39: #{grn_forward.1} parent=5 // pred_region
        %s443 = ssub.s32 %s14, 2
        // Predicated region
        $region41: #{grn_forward.1} parent=39 // pred_check
          %p444 = pneg %p90
        $region42: #{grn_forward.1} parent=39 // pred_check_branch
          %446 = sbr.rel (%p444) target = $region44
        $region43: #{grn_forward.1} parent=39 // pred_region
          %s447 = sand.u32 %s75, 1
          %s448 = scalar_lea.sflag [#allocation4], %s447
          %s449 = sand.u32 %s75, 1
          %s450 = smul.addr %s449, 256
          %s451 = scalar_lea.vmem [#allocation5], %s450
          %452 = dma.done %s448, 4096
        $region44: #{grn_forward.1} parent=39 // pred_fallthru
          _
      $region40: #{grn_forward.1} parent=5 // pred_fallthru
        _
    $region6: #{grn_forward.1} parent=1 // loop_footer
      %s18 = sadd.s32 1, %s14
    $region7: #{grn_forward.1} parent=1 // loop_footer_branch
      %13 = sbr.rel target = $region3
    $region8: #{grn_forward.1} parent=1 // loop_exit
      _
    %453 = vsyncpa [#allocation3], 1
    %s454 = scalar_lea.sflag [#allocation3], 1
    %455 = vsyncpa %s454, 1
    %456 = vsyncpa [#allocation4], 1
    %s457 = scalar_lea.sflag [#allocation4], 1
    %458 = vsyncpa %s457, 1

</llo_original>
